<compile_context>
chip_gen: v7x
topology: tpu7x:2x2x1
jax: 0.10.0
libtpu: 0.0.40
codegen_flags: <defaults>
</compile_context>

<pallas_src>
import jax
import jax.numpy as jnp
from jax import lax
from jax.experimental import pallas as pl
from jax.experimental.pallas import tpu as pltpu


def _round_up(n, m):
    return -(-n // m) * m


def _cdiv(a, b):
    return -(-a // b)


def _chip_defaults():
    """Per-generation (t_tile, i_tile, vmem_limit_bytes)."""
    try:
        cap = pltpu.get_tpu_info().vmem_capacity_bytes
    except Exception:
        cap = None
    if cap is not None and cap >= 96 * 1024 * 1024:        # v5e / v6e: 128 MiB VMEM
        return 256, 512, 100 * 1024 * 1024
    return 256, 256, 48 * 1024 * 1024                      # v7x (64 MiB) / unknown


# ------------------------- one-time weight preprocessing -------------------------
def prepare_llama4_moe_weights(wg_e, wu_e, wd_e, wg_s, wu_s, wd_s, *,
                               i_tile=None, compute_dtype=jnp.bfloat16):
    """Pack expert weights once (load time), NOT per forward call.

    Inputs follow the PyTorch nn.Linear [out, in] convention:
      routed: wg_e/wu_e [E, I, H], wd_e [E, H, I]
      shared: wg_s/wu_s [I_S, H],  wd_s [H, I_S]
    Returns a dict of pre-transposed, bf16, zero-padded, gate+up-fused weights with
    the shared expert packed as slot 0 (always active) and routed experts 1..E.
    """
    E, I, H = wg_e.shape
    I_S = wg_s.shape[0]
    if i_tile is None:
        _, i_tile, _ = _chip_defaults()
    I_max = max(I, I_S)
    i_tile = min(i_tile, _round_up(I_max, 128))
    assert i_tile % 128 == 0 and H % 128 == 0
    I_pad = _round_up(I_max, i_tile)
    n_it = I_pad // i_tile
    cd = compute_dtype

    def pack_in_out(w_routed, w_shared):
        # routed [E, I, H] -> [E, H, I_pad]; shared [I_S, H] -> [1, H, I_pad]
        r = jnp.pad(jnp.swapaxes(w_routed, 1, 2).astype(cd),
                    ((0, 0), (0, 0), (0, I_pad - I)))
        s = jnp.pad(w_shared.T.astype(cd), ((0, 0), (0, I_pad - I_S)))[None]
        return jnp.concatenate([s, r], axis=0)            # slot 0 = shared expert

    g_all = pack_in_out(wg_e, wg_s)                        # [E+1, H, I_pad]
    u_all = pack_in_out(wu_e, wu_s)                        # [E+1, H, I_pad]
    # Fuse gate+up per intermediate tile: block it holds [gate_tile | up_tile].
    wgu_all = jnp.concatenate(
        [g_all.reshape(E + 1, H, n_it, i_tile),
         u_all.reshape(E + 1, H, n_it, i_tile)], axis=-1
    ).reshape(E + 1, H, 2 * I_pad)                         # [E+1, H, 2*I_pad]

    wd_r = jnp.pad(jnp.swapaxes(wd_e, 1, 2).astype(cd),
                   ((0, 0), (0, I_pad - I), (0, 0)))
    wd_s_p = jnp.pad(wd_s.T.astype(cd), ((0, I_pad - I_S), (0, 0)))[None]
    wd_all = jnp.concatenate([wd_s_p, wd_r], axis=0)       # [E+1, I_pad, H]

    # number of REAL (non-zero-padded) intermediate tiles per expert slot
    nit = jnp.array([_cdiv(I_S, i_tile)] + [_cdiv(I, i_tile)] * E, jnp.int32)

    return dict(wgu=wgu_all, wd=wd_all, nit=nit, i_tile=i_tile, I_pad=I_pad,
                E=E, H=H, I=I, I_S=I_S, compute_dtype=cd)


# ------------------------------- fused MoE kernel -------------------------------
def _moe_kernel(eblk_ref, itlo_ref, ithi_ref,           # scalar-prefetch (SMEM)
                x_ref, scale_ref, wgu_ref, wd_ref,      # inputs (VMEM tiles)
                o_ref,                                   # output
                acc_ref, xs_ref):                        # scratch
    t = pl.program_id(0)
    e = pl.program_id(1)
    it = pl.program_id(2)
    n_e = pl.num_programs(1)
    n_it = pl.num_programs(2)
    idx = t * n_e + e

    @pl.when(jnp.logical_and(e == 0, it == 0))
    def _init():
        acc_ref[...] = jnp.zeros_like(acc_ref)

    # Compute only if this expert slot is active for THIS token tile
    # (eblk == e exactly when active) and this intermediate tile is not padding.
    compute = jnp.logical_and(eblk_ref[idx] == e, it <= ithi_ref[idx])

    @pl.when(compute)
    def _compute():
        # apply_router_weight_on_input=True: scale input by the sigmoid top-k
        # score (1.0 for the shared expert). Computed once per (tile, expert),
        # cached in bf16 VMEM scratch and reused across intermediate tiles.
        @pl.when(it == 0)
        def _scale_input():
            xs_ref[...] = (x_ref[...].astype(jnp.float32)
                           * scale_ref[0]).astype(xs_ref.dtype)

        xs = xs_ref[...]
        gu = jnp.dot(xs, wgu_ref[0], preferred_element_type=jnp.float32)  # [tT, 2*tI]
        half = gu.shape[-1] // 2
        g = gu[:, :half]
        u = gu[:, half:]
        h = (g * jax.nn.sigmoid(g) * u).astype(wd_ref.dtype)              # silu in f32
        acc_ref[...] += jnp.dot(h, wd_ref[0], preferred_element_type=jnp.float32)

    @pl.when(jnp.logical_and(e == n_e - 1, it == n_it - 1))
    def _finalize():
        o_ref[...] = acc_ref[...].astype(o_ref.dtype)


# ----------------------------------- wrapper -----------------------------------
def llama4_moe_pallas(x, w_router, weights, *, top_k,
                      t_tile=None, vmem_limit_bytes=None):
    """x: [T, H]; w_router: [E, H]; weights: dict from prepare_llama4_moe_weights."""
    T, H = x.shape
    E = weights["E"]
    assert H == weights["H"] and H % 128 == 0
    i_tile = weights["i_tile"]
    I_pad = weights["I_pad"]
    nit = weights["nit"]                                  # [E+1] int32
    cd = weights["compute_dtype"]
    n_e = E + 1
    n_it_grid = I_pad // i_tile

    d_t, _, d_v = _chip_defaults()
    t_tile = d_t if t_tile is None else t_tile
    vmem_limit_bytes = d_v if vmem_limit_bytes is None else vmem_limit_bytes

    t_tile = min(t_tile, _round_up(T, 16))
    assert t_tile % 16 == 0                               # bf16 native (16, 128) tile
    T_pad = _round_up(T, t_tile)
    n_t = T_pad // t_tile

    # ---- routing, hoisted out of the kernel (tiny [T, E] work, exact top-k ties) ----
    f32 = jnp.float32
    logits = jnp.dot(x.astype(f32), w_router.T.astype(f32))           # [T, E]
    topv, topi = lax.top_k(jax.nn.sigmoid(logits), top_k)             # sigmoid monotone
    scale_te = jnp.zeros((T, E), f32).at[
        jnp.arange(T)[:, None], topi].set(topv)                       # [T, E]
    scale_pad = jnp.pad(scale_te, ((0, T_pad - T), (0, 0)))           # [T_pad, E]

    valid = (jnp.arange(T_pad) < T).astype(f32)
    scale_all = jnp.concatenate([
        valid[None, :, None],                                         # shared: scale 1
        scale_pad.T[:, :, None],                                      # routed experts
    ], axis=0)                                                        # [E+1, T_pad, 1]

    # ---- per-(token-tile, expert) activity + weight-block remap tables ----
    act_routed = (scale_pad.reshape(n_t, t_tile, E) > 0).any(axis=1)  # [n_t, E]
    act = jnp.concatenate(
        [jnp.ones((n_t, 1), bool), act_routed], axis=1)               # [n_t, E+1]
    slot = jnp.arange(n_e, dtype=jnp.int32)
    # last active expert slot <= e (slot 0 = shared is always active)
    eblk = lax.cummax(jnp.where(act, slot[None, :], jnp.int32(0)), axis=1)
    ithi = (nit - 1)[eblk]                                            # [n_t, E+1]
    itlo = jnp.where(act, jnp.int32(0), ithi)                         # [n_t, E+1]

    eblk_f = eblk.reshape(-1).astype(jnp.int32)
    itlo_f = itlo.reshape(-1).astype(jnp.int32)
    ithi_f = ithi.reshape(-1).astype(jnp.int32)

    x_pad = jnp.pad(x, ((0, T_pad - T), (0, 0))).astype(cd)           # [T_pad, H]

    # Index maps: inactive experts / zero-padded intermediate tiles re-use the block
    # that is already resident (same block index as the previous grid step), so the
    # pipeline emitter skips the weight DMA; compute is gated off in the kernel.
    def x_idx(t, e, it, eb, lo, hi):
        return (t, 0)

    def s_idx(t, e, it, eb, lo, hi):
        return (eb[t * n_e + e], t, 0)

    def wgu_idx(t, e, it, eb, lo, hi):
        i = t * n_e + e
        return (eb[i], 0, jnp.minimum(jnp.maximum(it, lo[i]), hi[i]))

    def wd_idx(t, e, it, eb, lo, hi):
        i = t * n_e + e
        return (eb[i], jnp.minimum(jnp.maximum(it, lo[i]), hi[i]), 0)

    def o_idx(t, e, it, eb, lo, hi):
        return (t, 0)

    grid = (n_t, n_e, n_it_grid)

    out_pad = pl.pallas_call(
        _moe_kernel,
        out_shape=jax.ShapeDtypeStruct((T_pad, H), x.dtype),
        grid_spec=pltpu.PrefetchScalarGridSpec(
            num_scalar_prefetch=3,                        # eblk, itlo, ithi -> SMEM
            grid=grid,
            in_specs=[
                pl.BlockSpec((t_tile, H), x_idx),                  # x (resident per t)
                pl.BlockSpec((1, t_tile, 1), s_idx),               # per-expert scale
                pl.BlockSpec((1, H, 2 * i_tile), wgu_idx),         # fused gate|up [in,out]
                pl.BlockSpec((1, i_tile, H), wd_idx),              # down [in,out]
            ],
            out_specs=pl.BlockSpec((t_tile, H), o_idx),
            scratch_shapes=[pltpu.VMEM((t_tile, H), jnp.float32),  # f32 accumulator
                            pltpu.VMEM((t_tile, H), cd)],          # cached scaled input
        ),
        compiler_params=pltpu.CompilerParams(
            dimension_semantics=("parallel", "arbitrary", "arbitrary"),
            vmem_limit_bytes=vmem_limit_bytes,
        ),
    )(eblk_f, itlo_f, ithi_f, x_pad, scale_all, weights["wgu"], weights["wd"])

    return out_pad[:T]


# ----------------------------------- reference -----------------------------------
def llama4_moe_reference(x, w_router, wg_e, wu_e, wd_e, wg_s, wu_s, wd_s, *, top_k):
    f32 = jnp.float32
    T, H = x.shape
    E = w_router.shape[0]
    x32 = x.astype(f32)
    logits = x32 @ w_router.astype(f32).T
    topv, topi = lax.top_k(jax.nn.sigmoid(logits), top_k)
    scale = jnp.zeros((T, E), f32).at[jnp.arange(T)[:, None], topi].set(topv)
    routed = jnp.zeros((T, H), f32)
    for e in range(E):
        xs = x32 * scale[:, e:e + 1]
        g = xs @ wg_e[e].astype(f32).T
        u = xs @ wu_e[e].astype(f32).T
        routed = routed + (jax.nn.silu(g) * u) @ wd_e[e].astype(f32).T
    shared = (jax.nn.silu(x32 @ wg_s.astype(f32).T)
              * (x32 @ wu_s.astype(f32).T)) @ wd_s.astype(f32).T
    return (shared + routed).astype(x.dtype)


# ------------------------------------- main -------------------------------------
if __name__ == "__main__":
    # Small, TPU-tile-friendly sizes. I_S != I exercises the per-expert nit gating;
    # t_tile=16 / i_tile=128 are deliberately tiny so multiple token tiles,
    # per-tile expert skipping, and the DMA-reuse remap are all exercised.
    # (Production defaults come from _chip_defaults(): t_tile=256, i_tile=256-512.)
    T = 48          # num tokens
    H = 128         # hidden_size
    I = 256         # intermediate_size (routed experts)
    I_S = 384       # shared_expert_intermediate_size
    E = 8           # num_experts
    TOP_K = 1

    key = jax.random.PRNGKey(0)
    ks = jax.random.split(key, 8)
    dt = jnp.bfloat16

    x = jax.random.normal(ks[0], (T, H), jnp.float32).astype(dt)
    w_router = (jax.random.normal(ks[1], (E, H), jnp.float32) / jnp.sqrt(H)).astype(dt)
    wg_e = (jax.random.normal(ks[2], (E, I, H), jnp.float32) / jnp.sqrt(H)).astype(dt)
    wu_e = (jax.random.normal(ks[3], (E, I, H), jnp.float32) / jnp.sqrt(H)).astype(dt)
    wd_e = (jax.random.normal(ks[4], (E, H, I), jnp.float32) / jnp.sqrt(I)).astype(dt)
    wg_s = (jax.random.normal(ks[5], (I_S, H), jnp.float32) / jnp.sqrt(H)).astype(dt)
    wu_s = (jax.random.normal(ks[6], (I_S, H), jnp.float32) / jnp.sqrt(H)).astype(dt)
    wd_s = (jax.random.normal(ks[7], (H, I_S), jnp.float32) / jnp.sqrt(I_S)).astype(dt)

    # One-time weight preprocessing (in a real model: at weight-load time).
    prepared = prepare_llama4_moe_weights(wg_e, wu_e, wd_e, wg_s, wu_s, wd_s,
                                          i_tile=128)

    out = llama4_moe_pallas(x, w_router, prepared, top_k=TOP_K, t_tile=16)
    out = jax.block_until_ready(out)

    ref = llama4_moe_reference(x, w_router, wg_e, wu_e, wd_e, wg_s, wu_s, wd_s,
                               top_k=TOP_K)
    assert out.shape == (T, H) and out.dtype == dt
    o32, r32 = out.astype(jnp.float32), ref.astype(jnp.float32)
    max_err = float(jnp.max(jnp.abs(o32 - r32)))
    assert jnp.allclose(o32, r32, rtol=5e-2, atol=5e-2), max_err

    print("KERNEL_OK")
</pallas_src>

<mosaic_0001>
module attributes {stable_mosaic.version = 11 : i64} {
  func.func @_moe_kernel(%arg0: i32, %arg1: i32, %arg2: i32, %arg3: memref<27xi32, #tpu.memory_space<smem>>, %arg4: memref<27xi32, #tpu.memory_space<smem>>, %arg5: memref<27xi32, #tpu.memory_space<smem>>, %arg6: memref<16x128xbf16, #tpu.memory_space<vmem>>, %arg7: memref<1x16x1xf32, #tpu.memory_space<vmem>>, %arg8: memref<1x128x256xbf16, #tpu.memory_space<vmem>>, %arg9: memref<1x128x128xbf16, #tpu.memory_space<vmem>>, %arg10: memref<16x128xbf16, #tpu.memory_space<vmem>>, %arg11: memref<16x128xf32, #tpu.memory_space<vmem>>, %arg12: memref<16x128xbf16, #tpu.memory_space<vmem>>) attributes {dimension_semantics = [#tpu.dimension_semantics<parallel>, #tpu.dimension_semantics<arbitrary>, #tpu.dimension_semantics<arbitrary>], iteration_bounds = array<i64: 3, 9, 3>, scalar_prefetch = 3 : i64, scratch_operands = 2 : i64, tpu.core_type = #tpu.core_type<tc>, window_params = [{transform_indices = @transform_0, window_bounds = array<i64: 16, 128>}, {transform_indices = @transform_1, window_bounds = array<i64: 1, 16, 1>}, {transform_indices = @transform_2, window_bounds = array<i64: 1, 128, 256>}, {transform_indices = @transform_3, window_bounds = array<i64: 1, 128, 128>}, {transform_indices = @transform_4, window_bounds = array<i64: 16, 128>}]} {
    %c9_i32 = arith.constant 9 : i32
    %0 = arith.muli %arg0, %c9_i32 : i32
    %1 = arith.addi %0, %arg1 : i32
    %c0_i32 = arith.constant 0 : i32
    %2 = arith.cmpi eq, %arg1, %c0_i32 : i32
    %c0_i32_0 = arith.constant 0 : i32
    %3 = arith.cmpi eq, %arg2, %c0_i32_0 : i32
    %4 = arith.andi %2, %3 : i1
    %5 = arith.extui %4 : i1 to i32
    %c0_i32_1 = arith.constant 0 : i32
    %6 = arith.cmpi ne, %5, %c0_i32_1 : i32
    scf.if %6 {
      %cst = arith.constant 0.000000e+00 : f32
      %21 = vector.broadcast %cst : f32 to vector<16x128xf32>
      %c0 = arith.constant 0 : index
      %c0_4 = arith.constant 0 : index
      %22 = vector.load %arg11[%c0, %c0_4] : memref<16x128xf32, #tpu.memory_space<vmem>>, vector<16x128xf32>
      tpu.vector_store %arg11[%c0, %c0_4], %21 {strides = array<i32>} : memref<16x128xf32, #tpu.memory_space<vmem>>, vector<16x128xf32>,
    } else {
    }
    %7 = arith.index_cast %1 : i32 to index
    %8 = memref.load %arg3[%7] : memref<27xi32, #tpu.memory_space<smem>>
    %9 = arith.cmpi eq, %8, %arg1 : i32
    %10 = arith.index_cast %1 : i32 to index
    %11 = memref.load %arg5[%10] : memref<27xi32, #tpu.memory_space<smem>>
    %12 = arith.cmpi sle, %arg2, %11 : i32
    %13 = arith.andi %9, %12 : i1
    %14 = arith.extui %13 : i1 to i32
    %c0_i32_2 = arith.constant 0 : i32
    %15 = arith.cmpi ne, %14, %c0_i32_2 : i32
    scf.if %15 {
      %c0_i32_4 = arith.constant 0 : i32
      %21 = arith.cmpi eq, %arg2, %c0_i32_4 : i32
      %22 = arith.extui %21 : i1 to i32
      %c0_i32_5 = arith.constant 0 : i32
      %23 = arith.cmpi ne, %22, %c0_i32_5 : i32
      scf.if %23 {
        %c0_19 = arith.constant 0 : index
        %c0_20 = arith.constant 0 : index
        %44 = vector.load %arg6[%c0_19, %c0_20] : memref<16x128xbf16, #tpu.memory_space<vmem>>, vector<16x128xbf16>
        %45 = arith.extf %44 : vector<16x128xbf16> to vector<16x128xf32>
        %c0_21 = arith.constant 0 : index
        %c0_22 = arith.constant 0 : index
        %c0_23 = arith.constant 0 : index
        %46 = vector.load %arg7[%c0_21, %c0_22, %c0_23] : memref<1x16x1xf32, #tpu.memory_space<vmem>>, vector<1x16x1xf32>
        %47 = vector.shape_cast %46 : vector<1x16x1xf32> to vector<16x1xf32>
        %48 = vector.broadcast %47 : vector<16x1xf32> to vector<16x128xf32>
        %49 = arith.mulf %45, %48 : vector<16x128xf32>
        %50 = arith.truncf %49 : vector<16x128xf32> to vector<16x128xbf16>
        %c0_24 = arith.constant 0 : index
        %c0_25 = arith.constant 0 : index
        %51 = vector.load %arg12[%c0_24, %c0_25] : memref<16x128xbf16, #tpu.memory_space<vmem>>, vector<16x128xbf16>
        tpu.vector_store %arg12[%c0_24, %c0_25], %50 {strides = array<i32>} : memref<16x128xbf16, #tpu.memory_space<vmem>>, vector<16x128xbf16>,
      } else {
      }
      %c0 = arith.constant 0 : index
      %c0_6 = arith.constant 0 : index
      %24 = vector.load %arg12[%c0, %c0_6] : memref<16x128xbf16, #tpu.memory_space<vmem>>, vector<16x128xbf16>
      %c0_7 = arith.constant 0 : index
      %c0_8 = arith.constant 0 : index
      %c0_9 = arith.constant 0 : index
      %25 = vector.load %arg8[%c0_7, %c0_8, %c0_9] : memref<1x128x256xbf16, #tpu.memory_space<vmem>>, vector<1x128x256xbf16>
      %26 = vector.shape_cast %25 : vector<1x128x256xbf16> to vector<128x256xbf16>
      %cst = arith.constant dense<0.000000e+00> : vector<16x256xf32>
      %27 = tpu.matmul %24, %26, %cst {dimension_numbers = #tpu.dot_dimension_numbers<[1], [0], [0], [1], [0, 0, 1, 1], [], []>} : vector<16x128xbf16>, vector<128x256xbf16>, vector<16x256xf32> -> vector<16x256xf32>
      %28 = vector.extract_strided_slice %27 {offsets = [0, 0], sizes = [16, 128], strides = [1, 1]} : vector<16x256xf32> to vector<16x128xf32>
      %29 = vector.extract_strided_slice %27 {offsets = [0, 128], sizes = [16, 128], strides = [1, 1]} : vector<16x256xf32> to vector<16x128xf32>
      %30 = arith.negf %28 : vector<16x128xf32>
      %31 = math.exp %30 : vector<16x128xf32>
      %cst_10 = arith.constant 1.000000e+00 : f32
      %32 = vector.broadcast %cst_10 : f32 to vector<16x128xf32>
      %33 = arith.addf %32, %31 : vector<16x128xf32>
      %34 = arith.divf %32, %33 : vector<16x128xf32>
      %35 = arith.mulf %28, %34 : vector<16x128xf32>
      %36 = arith.mulf %35, %29 : vector<16x128xf32>
      %37 = arith.truncf %36 : vector<16x128xf32> to vector<16x128xbf16>
      %c0_11 = arith.constant 0 : index
      %c0_12 = arith.constant 0 : index
      %38 = vector.load %arg11[%c0_11, %c0_12] : memref<16x128xf32, #tpu.memory_space<vmem>>, vector<16x128xf32>
      %c0_13 = arith.constant 0 : index
      %c0_14 = arith.constant 0 : index
      %c0_15 = arith.constant 0 : index
      %39 = vector.load %arg9[%c0_13, %c0_14, %c0_15] : memref<1x128x128xbf16, #tpu.memory_space<vmem>>, vector<1x128x128xbf16>
      %40 = vector.shape_cast %39 : vector<1x128x128xbf16> to vector<128x128xbf16>
      %cst_16 = arith.constant dense<0.000000e+00> : vector<16x128xf32>
      %41 = tpu.matmul %37, %40, %cst_16 {dimension_numbers = #tpu.dot_dimension_numbers<[1], [0], [0], [1], [0, 0, 1, 1], [], []>} : vector<16x128xbf16>, vector<128x128xbf16>, vector<16x128xf32> -> vector<16x128xf32>
      %42 = arith.addf %38, %41 : vector<16x128xf32>
      %c0_17 = arith.constant 0 : index
      %c0_18 = arith.constant 0 : index
      %43 = vector.load %arg11[%c0_17, %c0_18] : memref<16x128xf32, #tpu.memory_space<vmem>>, vector<16x128xf32>
      tpu.vector_store %arg11[%c0_17, %c0_18], %42 {strides = array<i32>} : memref<16x128xf32, #tpu.memory_space<vmem>>, vector<16x128xf32>,
    } else {
    }
    %c8_i32 = arith.constant 8 : i32
    %16 = arith.cmpi eq, %arg1, %c8_i32 : i32
    %c2_i32 = arith.constant 2 : i32
    %17 = arith.cmpi eq, %arg2, %c2_i32 : i32
    %18 = arith.andi %16, %17 : i1
    %19 = arith.extui %18 : i1 to i32
    %c0_i32_3 = arith.constant 0 : i32
    %20 = arith.cmpi ne, %19, %c0_i32_3 : i32
    scf.if %20 {
      %c0 = arith.constant 0 : index
      %c0_4 = arith.constant 0 : index
      %21 = vector.load %arg11[%c0, %c0_4] : memref<16x128xf32, #tpu.memory_space<vmem>>, vector<16x128xf32>
      %22 = arith.truncf %21 : vector<16x128xf32> to vector<16x128xbf16>
      %c0_5 = arith.constant 0 : index
      %c0_6 = arith.constant 0 : index
      %23 = vector.load %arg10[%c0_5, %c0_6] : memref<16x128xbf16, #tpu.memory_space<vmem>>, vector<16x128xbf16>
      tpu.vector_store %arg10[%c0_5, %c0_6], %22 {strides = array<i32>} : memref<16x128xbf16, #tpu.memory_space<vmem>>, vector<16x128xbf16>,
    } else {
    }
    return
  }
  func.func @transform_0(%arg0: i32, %arg1: i32, %arg2: i32, %arg3: memref<27xi32, #tpu.memory_space<smem>>, %arg4: memref<27xi32, #tpu.memory_space<smem>>, %arg5: memref<27xi32, #tpu.memory_space<smem>>) -> (i32, i32) {
    %c0_i32 = arith.constant 0 : i32
    %c0_i32_0 = arith.constant 0 : i32
    return %arg0, %c0_i32 : i32, i32
  }
  func.func @transform_1(%arg0: i32, %arg1: i32, %arg2: i32, %arg3: memref<27xi32, #tpu.memory_space<smem>>, %arg4: memref<27xi32, #tpu.memory_space<smem>>, %arg5: memref<27xi32, #tpu.memory_space<smem>>) -> (i32, i32, i32) {
    %c9_i32 = arith.constant 9 : i32
    %0 = arith.muli %arg0, %c9_i32 : i32
    %1 = arith.addi %0, %arg1 : i32
    %2 = arith.index_cast %1 : i32 to index
    %3 = memref.load %arg3[%2] : memref<27xi32, #tpu.memory_space<smem>>
    %c0_i32 = arith.constant 0 : i32
    %c0_i32_0 = arith.constant 0 : i32
    return %3, %arg0, %c0_i32 : i32, i32, i32
  }
  func.func @transform_2(%arg0: i32, %arg1: i32, %arg2: i32, %arg3: memref<27xi32, #tpu.memory_space<smem>>, %arg4: memref<27xi32, #tpu.memory_space<smem>>, %arg5: memref<27xi32, #tpu.memory_space<smem>>) -> (i32, i32, i32) {
    %c9_i32 = arith.constant 9 : i32
    %0 = arith.muli %arg0, %c9_i32 : i32
    %1 = arith.addi %0, %arg1 : i32
    %2 = arith.index_cast %1 : i32 to index
    %3 = memref.load %arg3[%2] : memref<27xi32, #tpu.memory_space<smem>>
    %4 = arith.index_cast %1 : i32 to index
    %5 = memref.load %arg4[%4] : memref<27xi32, #tpu.memory_space<smem>>
    %6 = arith.maxsi %arg2, %5 : i32
    %7 = arith.index_cast %1 : i32 to index
    %8 = memref.load %arg5[%7] : memref<27xi32, #tpu.memory_space<smem>>
    %9 = arith.minsi %6, %8 : i32
    %c0_i32 = arith.constant 0 : i32
    %c0_i32_0 = arith.constant 0 : i32
    return %3, %c0_i32, %9 : i32, i32, i32
  }
  func.func @transform_3(%arg0: i32, %arg1: i32, %arg2: i32, %arg3: memref<27xi32, #tpu.memory_space<smem>>, %arg4: memref<27xi32, #tpu.memory_space<smem>>, %arg5: memref<27xi32, #tpu.memory_space<smem>>) -> (i32, i32, i32) {
    %c9_i32 = arith.constant 9 : i32
    %0 = arith.muli %arg0, %c9_i32 : i32
    %1 = arith.addi %0, %arg1 : i32
    %2 = arith.index_cast %1 : i32 to index
    %3 = memref.load %arg3[%2] : memref<27xi32, #tpu.memory_space<smem>>
    %4 = arith.index_cast %1 : i32 to index
    %5 = memref.load %arg4[%4] : memref<27xi32, #tpu.memory_space<smem>>
    %6 = arith.maxsi %arg2, %5 : i32
    %7 = arith.index_cast %1 : i32 to index
    %8 = memref.load %arg5[%7] : memref<27xi32, #tpu.memory_space<smem>>
    %9 = arith.minsi %6, %8 : i32
    %c0_i32 = arith.constant 0 : i32
    %c0_i32_0 = arith.constant 0 : i32
    return %3, %9, %c0_i32 : i32, i32, i32
  }
  func.func @transform_4(%arg0: i32, %arg1: i32, %arg2: i32, %arg3: memref<27xi32, #tpu.memory_space<smem>>, %arg4: memref<27xi32, #tpu.memory_space<smem>>, %arg5: memref<27xi32, #tpu.memory_space<smem>>) -> (i32, i32) {
    %c0_i32 = arith.constant 0 : i32
    %c0_i32_0 = arith.constant 0 : i32
    return %arg0, %c0_i32 : i32, i32
  }
}

</mosaic_0001>

<llo_original>
// kernel: tpu_custom_call.1
$region0: #{tpu_custom_call.1}
  #allocation0 [shape = 'u32[]', space=smem, size = 0x4, offset = 0x4, fixed_abs, tag = 'smem constant byte address 0x4 - core index']
  #allocation1 [shape = 'u32[144,128]{1,0:T(1,128)}', space=vmem, size = 0x12000, scoped, tag = 'internal scratch']
  #allocation2 [shape = 'f32[16,128]{1,0:T(8,128)}', space=vmem, size = 0x2000, scoped, tag = 'scratch operand']
  #allocation3 [shape = 'bf16[16,128]{1,0:T(16,128)(2,1)}', space=vmem, size = 0x1000, scoped, tag = 'scratch operand']
  #allocation4 [shape = 's32[1]{0}', space=sflag, size = 0x4, scoped, tag = 'scoped memory for tpu_custom_call.1']
  #allocation5 [shape = 'u8[512]{0}', space=smem, size = 0x200, scoped, tag = 'prefetched SMEM operand 0']
  #allocation6 [shape = 'u8[512]{0}', space=smem, size = 0x200, scoped, tag = 'prefetched SMEM operand 1']
  #allocation7 [shape = 'u8[512]{0}', space=smem, size = 0x200, scoped, tag = 'prefetched SMEM operand 2']
  %s0 = inlined_call_operand.hbm [shape: s32[27], index: 0, kind: input, shape index: {}]
  %s1 = inlined_call_operand.hbm [shape: s32[27], index: 1, kind: input, shape index: {}]
  %s2 = inlined_call_operand.hbm [shape: s32[27], index: 2, kind: input, shape index: {}]
  %s3 = inlined_call_operand.hbm [shape: bf16[48,128], index: 3, kind: input, shape index: {}]
  %s4 = inlined_call_operand.vmem [shape: f32[9,48,1], index: 4, kind: input, shape index: {}]
  %s5 = inlined_call_operand.hbm [shape: bf16[9,128,768], index: 5, kind: input, shape index: {}]
  %s6 = inlined_call_operand.hbm [shape: bf16[9,384,128], index: 6, kind: input, shape index: {}]
  %s7 = inlined_call_operand.hbm [shape: bf16[48,128], index: 7, kind: output, shape index: {}]
  %s8 = sld [smem:[#allocation0]]
  $region77: #{tpu_custom_call.1} parent=0
    _
  %s10 = ssub.s32 1, %s8
  %s11 = scalar_select 0, %s10, %s8
  %13 = dma.hbm_to_smem %s0, 16, [#allocation5], [#allocation4]
  %15 = dma.hbm_to_smem %s1, 16, [#allocation6], [#allocation4]
  %17 = dma.hbm_to_smem %s2, 16, [#allocation7], [#allocation4]
  %18 = dma.done [#allocation4], 48
  %19 = sfence
  $region1: #{tpu_custom_call.1} parent=0
    #allocation8 [shape = 'u8[8192]{0}', space=vmem, size = 0x2000, scoped, tag = 'input window, operand 3']
    #allocation9 [shape = 's32[2]{0}', space=sflag, size = 0x8, scoped, tag = 'scoped memory for tpu_custom_call.1']
    #allocation10 [shape = 's32[2]{0}', space=sflag, size = 0x8, scoped, tag = 'scoped memory for tpu_custom_call.1']
    #allocation11 [shape = 'u8[131072]{0}', space=vmem, size = 0x20000, scoped, tag = 'input window, operand 5']
    #allocation12 [shape = 's32[2]{0}', space=sflag, size = 0x8, scoped, tag = 'scoped memory for tpu_custom_call.1']
    #allocation13 [shape = 'u8[65536]{0}', space=vmem, size = 0x10000, scoped, tag = 'input window, operand 6']
    #allocation14 [shape = 'u8[8192]{0}', space=vmem, size = 0x2000, scoped, tag = 'output window, operand 0']
    %20 = vsyncpa [#allocation9], 0
    %s21 = scalar_lea.sflag [#allocation9], 1
    %22 = vsyncpa %s21, 0
    %23 = vsyncpa [#allocation12], 0
    %s24 = scalar_lea.sflag [#allocation12], 1
    %25 = vsyncpa %s24, 0
    %26 = vsyncpa [#allocation10], 0
    %s27 = scalar_lea.sflag [#allocation10], 1
    %28 = vsyncpa %s27, 0
    loop: start=0, step=1, limit=83
    $region2: #{tpu_custom_call.1} parent=1 // loop_pre_header
      _
    $region3: #{tpu_custom_call.1} parent=1 // loop_header
      %s30 = sphi 0, %s34
      %p31 = scmp.ge.s32.totalorder %s30, 83
      %s37 = sphi 0, %s56
      %s38 = sphi 0, %s52
      %s39 = sphi 0, %s48
      %s40 = sphi 0, %s37
      %s41 = sphi 0, %s38
      %s42 = sphi 0, %s39
      %s43 = sphi 0, %s40
      %s44 = sphi 0, %s41
      %s45 = sphi 0, %s42
      %s59 = sphi 0, %s61
      %s62 = sphi 0, %s59
      %s63 = sphi 0, %s62
      %s79 = sphi 0, %s63
      %s93 = sphi 0, %s95
      %s96 = sphi 0, %s93
      %s97 = sphi 0, %s96
      %s113 = sphi 0, %s97
      %s139 = sphi 0, %s141
      %s142 = sphi 0, %s139
      %s143 = sphi 0, %s142
      %s159 = sphi 0, %s143
      %s185 = sphi 0, %s187
      %s188 = sphi 0, %s185
      %s189 = sphi 0, %s188
      %s205 = sphi 0, %s189
      %s211 = sphi 0, %s213
      %s214 = sphi 0, %s211
      %s215 = sphi 0, %s214
      %s231 = sphi 0, %s215
    $region4: #{tpu_custom_call.1} parent=1 // loop_header_branch
      %33 = sbr.rel (%p31) target = $region8
    $region5: #{tpu_custom_call.1} parent=1 // loop_body
      %s35 = ssub.s32 %s30, 1
      %s36 = ssub.s32 %s30, 2
      %s46 = sadd.s32 1, %s39
      %p47 = scmp.ge.s32.totalorder %s46, 3
      %s48 = scalar_select %p47, 0, %s46
      %s49 = sadd.s32 1, %s38
      %s50 = scalar_select %p47, %s49, %s38
      %p51 = scmp.ge.s32.totalorder %s50, 9
      %s52 = scalar_select %p51, 0, %s50
      %s53 = sadd.s32 1, %s37
      %s54 = scalar_select %p51, %s53, %s37
      %p55 = scmp.ge.s32.totalorder %s54, 3
      %s56 = scalar_select %p55, 0, %s54
      %s57 = ssub.s32 %s37, %s56
      %p58 = scmp.eq.s32.totalorder %s57, 0
      %s60 = sadd.s32 %s59, 1
      %s61 = scalar_select %p58, %s59, %s60
      %p64 = pneg %p58
      %p65 = scmp.eq.s32.totalorder %s30, 80
      %p66 = por %p64, %p65
      %p67 = scmp.ne.s32.totalorder %s59, %s62
      %p68 = scmp.eq.s32.totalorder %s30, 0
      %p69 = por %p67, %p68
      %p70 = scmp.ne.s32.totalorder %s59, %s62
      %p71 = scmp.eq.s32.totalorder %s35, 80
      %p72 = por %p70, %p71
      %p73 = scmp.ne.s32.totalorder %s62, %s63
      %p74 = scmp.eq.s32.totalorder %s35, 0
      %p75 = por %p73, %p74
      %p76 = scmp.ne.s32.totalorder %s62, %s63
      %p77 = scmp.eq.s32.totalorder %s36, 80
      %p78 = por %p76, %p77
      %p80 = scmp.ne.s32.totalorder %s63, %s79
      %p81 = scmp.eq.s32.totalorder %s36, 0
      %p82 = por %p80, %p81
      %s83 = smul.u32 %s37, 9
      %s84 = sadd.s32 %s83, %s38
      %s85 = sld [smem:[#allocation5 + %s84]]
      %s86 = smul.u32 %s56, 9
      %s87 = sadd.s32 %s86, %s52
      %s88 = sld [smem:[#allocation5 + %s87]]
      %s89 = ssub.s32 %s85, %s88
      %s90 = ssub.s32 %s37, %s56
      %s91 = sor.u32 %s89, %s90
      %p92 = scmp.eq.s32.totalorder %s91, 0
      %s94 = sadd.s32 %s93, 1
      %s95 = scalar_select %p92, %s93, %s94
      %p98 = pneg %p92
      %p99 = scmp.eq.s32.totalorder %s30, 80
      %p100 = por %p98, %p99
      %p101 = scmp.ne.s32.totalorder %s93, %s96
      %p102 = scmp.eq.s32.totalorder %s30, 0
      %p103 = por %p101, %p102
      %p104 = scmp.ne.s32.totalorder %s93, %s96
      %p105 = scmp.eq.s32.totalorder %s35, 80
      %p106 = por %p104, %p105
      %p107 = scmp.ne.s32.totalorder %s96, %s97
      %p108 = scmp.eq.s32.totalorder %s35, 0
      %p109 = por %p107, %p108
      %p110 = scmp.ne.s32.totalorder %s96, %s97
      %p111 = scmp.eq.s32.totalorder %s36, 80
      %p112 = por %p110, %p111
      %p114 = scmp.ne.s32.totalorder %s97, %s113
      %p115 = scmp.eq.s32.totalorder %s36, 0
      %p116 = por %p114, %p115
      %s117 = smul.u32 %s37, 9
      %s118 = sadd.s32 %s117, %s38
      %s119 = sld [smem:[#allocation5 + %s118]]
      %s120 = sld [smem:[#allocation6 + %s118]]
      %p121 = scmp.gt.s32.totalorder %s39, %s120
      %s122 = scalar_select %p121, %s39, %s120
      %s123 = sld [smem:[#allocation7 + %s118]]
      %p124 = scmp.lt.s32.totalorder %s122, %s123
      %s125 = scalar_select %p124, %s122, %s123
      %s126 = smul.u32 %s56, 9
      %s127 = sadd.s32 %s126, %s52
      %s128 = sld [smem:[#allocation5 + %s127]]
      %s129 = sld [smem:[#allocation6 + %s127]]
      %p130 = scmp.gt.s32.totalorder %s48, %s129
      %s131 = scalar_select %p130, %s48, %s129
      %s132 = sld [smem:[#allocation7 + %s127]]
      %p133 = scmp.lt.s32.totalorder %s131, %s132
      %s134 = scalar_select %p133, %s131, %s132
      %s135 = ssub.s32 %s119, %s128
      %s136 = ssub.s32 %s125, %s134
      %s137 = sor.u32 %s135, %s136
      %p138 = scmp.eq.s32.totalorder %s137, 0
      %s140 = sadd.s32 %s139, 1
      %s141 = scalar_select %p138, %s139, %s140
      %p144 = pneg %p138
      %p145 = scmp.eq.s32.totalorder %s30, 80
      %p146 = por %p144, %p145
      %p147 = scmp.ne.s32.totalorder %s139, %s142
      %p148 = scmp.eq.s32.totalorder %s30, 0
      %p149 = por %p147, %p148
      %p150 = scmp.ne.s32.totalorder %s139, %s142
      %p151 = scmp.eq.s32.totalorder %s35, 80
      %p152 = por %p150, %p151
      %p153 = scmp.ne.s32.totalorder %s142, %s143
      %p154 = scmp.eq.s32.totalorder %s35, 0
      %p155 = por %p153, %p154
      %p156 = scmp.ne.s32.totalorder %s142, %s143
      %p157 = scmp.eq.s32.totalorder %s36, 80
      %p158 = por %p156, %p157
      %p160 = scmp.ne.s32.totalorder %s143, %s159
      %p161 = scmp.eq.s32.totalorder %s36, 0
      %p162 = por %p160, %p161
      %s163 = smul.u32 %s37, 9
      %s164 = sadd.s32 %s163, %s38
      %s165 = sld [smem:[#allocation5 + %s164]]
      %s166 = sld [smem:[#allocation6 + %s164]]
      %p167 = scmp.gt.s32.totalorder %s39, %s166
      %s168 = scalar_select %p167, %s39, %s166
      %s169 = sld [smem:[#allocation7 + %s164]]
      %p170 = scmp.lt.s32.totalorder %s168, %s169
      %s171 = scalar_select %p170, %s168, %s169
      %s172 = smul.u32 %s56, 9
      %s173 = sadd.s32 %s172, %s52
      %s174 = sld [smem:[#allocation5 + %s173]]
      %s175 = sld [smem:[#allocation6 + %s173]]
      %p176 = scmp.gt.s32.totalorder %s48, %s175
      %s177 = scalar_select %p176, %s48, %s175
      %s178 = sld [smem:[#allocation7 + %s173]]
      %p179 = scmp.lt.s32.totalorder %s177, %s178
      %s180 = scalar_select %p179, %s177, %s178
      %s181 = ssub.s32 %s165, %s174
      %s182 = ssub.s32 %s171, %s180
      %s183 = sor.u32 %s181, %s182
      %p184 = scmp.eq.s32.totalorder %s183, 0
      %s186 = sadd.s32 %s185, 1
      %s187 = scalar_select %p184, %s185, %s186
      %p190 = pneg %p184
      %p191 = scmp.eq.s32.totalorder %s30, 80
      %p192 = por %p190, %p191
      %p193 = scmp.ne.s32.totalorder %s185, %s188
      %p194 = scmp.eq.s32.totalorder %s30, 0
      %p195 = por %p193, %p194
      %p196 = scmp.ne.s32.totalorder %s185, %s188
      %p197 = scmp.eq.s32.totalorder %s35, 80
      %p198 = por %p196, %p197
      %p199 = scmp.ne.s32.totalorder %s188, %s189
      %p200 = scmp.eq.s32.totalorder %s35, 0
      %p201 = por %p199, %p200
      %p202 = scmp.ne.s32.totalorder %s188, %s189
      %p203 = scmp.eq.s32.totalorder %s36, 80
      %p204 = por %p202, %p203
      %p206 = scmp.ne.s32.totalorder %s189, %s205
      %p207 = scmp.eq.s32.totalorder %s36, 0
      %p208 = por %p206, %p207
      %s209 = ssub.s32 %s37, %s56
      %p210 = scmp.eq.s32.totalorder %s209, 0
      %s212 = sadd.s32 %s211, 1
      %s213 = scalar_select %p210, %s211, %s212
      %p216 = pneg %p210
      %p217 = scmp.eq.s32.totalorder %s30, 80
      %p218 = por %p216, %p217
      %p219 = scmp.ne.s32.totalorder %s211, %s214
      %p220 = scmp.eq.s32.totalorder %s30, 0
      %p221 = por %p219, %p220
      %p222 = scmp.ne.s32.totalorder %s211, %s214
      %p223 = scmp.eq.s32.totalorder %s35, 80
      %p224 = por %p222, %p223
      %p225 = scmp.ne.s32.totalorder %s214, %s215
      %p226 = scmp.eq.s32.totalorder %s35, 0
      %p227 = por %p225, %p226
      %p228 = scmp.ne.s32.totalorder %s214, %s215
      %p229 = scmp.eq.s32.totalorder %s36, 80
      %p230 = por %p228, %p229
      %p232 = scmp.ne.s32.totalorder %s215, %s231
      %p233 = scmp.eq.s32.totalorder %s36, 0
      %p234 = por %p232, %p233
      %p235 = scmp.le.s32.totalorder 1, %s30
      %p236 = scmp.lt.s32.totalorder %s30, 82
      %p237 = pnand %p235, %p236
      %p238 = pneg %p237
      // Predicated region
      $region9: #{tpu_custom_call.1} parent=5 // pred_check
        _
      $region10: #{tpu_custom_call.1} parent=5 // pred_check_branch
        %240 = sbr.rel (%p237) target = $region12
      $region11: #{tpu_custom_call.1} parent=5 // pred_region
        %s241 = ssub.s32 %s30, 1
      $region12: #{tpu_custom_call.1} parent=5 // pred_fallthru
        _
      %p242 = scmp.lt.s32.totalorder %s30, 81
      // Predicated region
      $region13: #{tpu_custom_call.1} parent=5 // pred_check
        %p243 = pneg %p242
      $region14: #{tpu_custom_call.1} parent=5 // pred_check_branch
        %245 = sbr.rel (%p243) target = $region16
      $region15: #{tpu_custom_call.1} parent=5 // pred_region
        // Predicated region
        $region17: #{tpu_custom_call.1} parent=15 // pred_check
          %p246 = pneg %p69
        $region18: #{tpu_custom_call.1} parent=15 // pred_check_branch
          %248 = sbr.rel (%p246) target = $region20
        $region19: #{tpu_custom_call.1} parent=15 // pred_region
          %s249 = sand.u32 %s59, 1
          %s250 = scalar_lea.sflag [#allocation9], %s249
          %s251 = sand.u32 %s59, 1
          %s252 = smul.addr %s251, 8
          %s253 = scalar_lea.vmem [#allocation8], %s252
          %s254 = smul.u32 2, %s37
          %s256 = ssub.s32 128, 128
          %257 = vsyncadd %s250, %s256
          %s258 = smul.addr %s254, 64
          %s259 = scalar_lea.hbm %s3, %s258
          %s260 = sshll.u32 %s253, 4
          %s261 = int_to_ptr.vmem [resolvable:$true] %s260
          %266 = dma.hbm_to_vmem [thread:$0]  %s259, 128, %s261, %s250, 64, 64, 4
        $region20: #{tpu_custom_call.1} parent=15 // pred_fallthru
          _
        // Predicated region
        $region21: #{tpu_custom_call.1} parent=15 // pred_check
          %p267 = pneg %p103
        $region22: #{tpu_custom_call.1} parent=15 // pred_check_branch
          %269 = sbr.rel (%p267) target = $region24
        $region23: #{tpu_custom_call.1} parent=15 // pred_region
          %s270 = smul.u32 %s37, 9
          %s271 = sadd.s32 %s270, %s38
          %s272 = sld [smem:[#allocation5 + %s271]]
          %s273 = smul.u32 2, %s37
          %p274 = scmp.lt.s32.totalorder %s272, 8
          %s275 = scalar_select %p274, %s272, 8
          %p276 = scmp.lt.s32.totalorder %s273, 5
          %s277 = scalar_select %p276, %s273, 5
          %s278 = smul.addr %s275, 6
          %s279 = sadd.s32 %s277, %s278
          %s280 = smul.addr %s279, 8
          %s281 = scalar_lea.vmem %s4, %s280
          %s282 = smul.u32 %s37, 9
          %s283 = sadd.s32 %s282, %s38
          %s284 = sld [smem:[#allocation5 + %s283]]
          %s285 = smul.u32 2, %s37
        $region24: #{tpu_custom_call.1} parent=15 // pred_fallthru
          _
        // Predicated region
        $region25: #{tpu_custom_call.1} parent=15 // pred_check
          %p286 = pneg %p149
        $region26: #{tpu_custom_call.1} parent=15 // pred_check_branch
          %288 = sbr.rel (%p286) target = $region28
        $region27: #{tpu_custom_call.1} parent=15 // pred_region
          %s289 = sand.u32 %s30, 1
          %s290 = scalar_lea.sflag [#allocation12], %s289
          %s291 = sand.u32 %s139, 1
          %s292 = smul.addr %s291, 128
          %s293 = scalar_lea.vmem [#allocation11], %s292
          %s294 = smul.u32 %s37, 9
          %s295 = sadd.s32 %s294, %s38
          %s296 = sld [smem:[#allocation5 + %s295]]
          %s297 = sld [smem:[#allocation6 + %s295]]
          %p298 = scmp.gt.s32.totalorder %s39, %s297
          %s299 = scalar_select %p298, %s39, %s297
          %s300 = sld [smem:[#allocation7 + %s295]]
          %p301 = scmp.lt.s32.totalorder %s299, %s300
          %s302 = scalar_select %p301, %s299, %s300
          %s303 = smul.u32 2, %s302
          %s305 = ssub.s32 2048, 2048
          %306 = vsyncadd %s290, %s305
          %s307 = smul.addr %s296, 96
          %s308 = sadd.s32 %s303, %s307
          %s309 = smul.addr %s308, 64
          %s310 = scalar_lea.hbm %s5, %s309
          %s311 = sshll.u32 %s293, 4
          %s312 = int_to_ptr.vmem [resolvable:$true] %s311
          %317 = dma.hbm_to_vmem [thread:$0]  %s310, 2048, %s312, %s290, 384, 128, 8
        $region28: #{tpu_custom_call.1} parent=15 // pred_fallthru
          _
        // Predicated region
        $region29: #{tpu_custom_call.1} parent=15 // pred_check
          %p318 = pneg %p195
        $region30: #{tpu_custom_call.1} parent=15 // pred_check_branch
          %320 = sbr.rel (%p318) target = $region32
        $region31: #{tpu_custom_call.1} parent=15 // pred_region
          %s321 = sand.u32 %s30, 1
          %s322 = scalar_lea.sflag [#allocation12], %s321
          %s323 = sand.u32 %s185, 1
          %s324 = smul.addr %s323, 64
          %s325 = scalar_lea.vmem [#allocation13], %s324
          %s326 = smul.u32 %s37, 9
          %s327 = sadd.s32 %s326, %s38
          %s328 = sld [smem:[#allocation5 + %s327]]
          %s329 = sld [smem:[#allocation6 + %s327]]
          %p330 = scmp.gt.s32.totalorder %s39, %s329
          %s331 = scalar_select %p330, %s39, %s329
          %s332 = sld [smem:[#allocation7 + %s327]]
          %p333 = scmp.lt.s32.totalorder %s331, %s332
          %s334 = scalar_select %p333, %s331, %s332
          %s335 = smul.u32 16, %s334
          %s337 = ssub.s32 1024, 1024
          %338 = vsyncadd %s322, %s337
          %s339 = smul.addr %s328, 48
          %s340 = sadd.s32 %s335, %s339
          %s341 = smul.addr %s340, 64
          %s342 = scalar_lea.hbm %s6, %s341
          %s343 = sshll.u32 %s325, 4
          %s344 = int_to_ptr.vmem [resolvable:$true] %s343
          %349 = dma.hbm_to_vmem [thread:$0]  %s342, 1024, %s344, %s322, 64, 64, 4
        $region32: #{tpu_custom_call.1} parent=15 // pred_fallthru
          _
      $region16: #{tpu_custom_call.1} parent=5 // pred_fallthru
        _
      %p350 = scmp.le.s32.totalorder 1, %s30
      %p351 = scmp.lt.s32.totalorder %s30, 82
      %p352 = pnand %p350, %p351
      %p353 = pneg %p352
      // Predicated region
      $region33: #{tpu_custom_call.1} parent=5 // pred_check
        _
      $region34: #{tpu_custom_call.1} parent=5 // pred_check_branch
        %355 = sbr.rel (%p352) target = $region36
      $region35: #{tpu_custom_call.1} parent=5 // pred_region
        %s356 = ssub.s32 %s30, 1
        %s357 = sand.u32 %s62, 1
        %s358 = scalar_lea.sflag [#allocation9], %s357
        %s359 = sand.u32 %s62, 1
        %s360 = smul.addr %s359, 8
        %s361 = scalar_lea.vmem [#allocation8], %s360
        // Predicated region
        $region37: #{tpu_custom_call.1} parent=35 // pred_check
          %p362 = pneg %p75
        $region38: #{tpu_custom_call.1} parent=35 // pred_check_branch
          %364 = sbr.rel (%p362) target = $region40
        $region39: #{tpu_custom_call.1} parent=35 // pred_region
          %365 = dma.done %s358, 128
        $region40: #{tpu_custom_call.1} parent=35 // pred_fallthru
          _
        %s366 = sand.u32 %s35, 1
        %s367 = scalar_lea.sflag [#allocation12], %s366
        %s368 = sand.u32 %s142, 1
        %s369 = smul.addr %s368, 128
        %s370 = scalar_lea.vmem [#allocation11], %s369
        // Predicated region
        $region41: #{tpu_custom_call.1} parent=35 // pred_check
          %p371 = pneg %p155
        $region42: #{tpu_custom_call.1} parent=35 // pred_check_branch
          %373 = sbr.rel (%p371) target = $region44
        $region43: #{tpu_custom_call.1} parent=35 // pred_region
          %374 = dma.done %s367, 2048
        $region44: #{tpu_custom_call.1} parent=35 // pred_fallthru
          _
        %s375 = sand.u32 %s35, 1
        %s376 = scalar_lea.sflag [#allocation12], %s375
        %s377 = sand.u32 %s188, 1
        %s378 = smul.addr %s377, 64
        %s379 = scalar_lea.vmem [#allocation13], %s378
        // Predicated region
        $region45: #{tpu_custom_call.1} parent=35 // pred_check
          %p380 = pneg %p201
        $region46: #{tpu_custom_call.1} parent=35 // pred_check_branch
          %382 = sbr.rel (%p380) target = $region48
        $region47: #{tpu_custom_call.1} parent=35 // pred_region
          %383 = dma.done %s376, 1024
        $region48: #{tpu_custom_call.1} parent=35 // pred_fallthru
          _
        %s384 = sand.u32 %s62, 1
        %s385 = scalar_lea.sflag [#allocation9], %s384
        %s386 = sand.u32 %s62, 1
        %s387 = smul.addr %s386, 8
        %s388 = scalar_lea.vmem [#allocation8], %s387
        %p389 = pneg %p75
        %p390 = pneg %p72
        %s391 = smul.u32 %s40, 9
        %s392 = sadd.s32 %s391, %s41
        %s393 = sld [smem:[#allocation5 + %s392]]
        %s394 = smul.u32 2, %s40
        %p395 = scmp.lt.s32.totalorder %s393, 8
        %s396 = scalar_select %p395, %s393, 8
        %p397 = scmp.lt.s32.totalorder %s394, 5
        %s398 = scalar_select %p397, %s394, 5
        %s399 = smul.addr %s396, 6
        %s400 = sadd.s32 %s398, %s399
        %s401 = smul.addr %s400, 8
        %s402 = scalar_lea.vmem %s4, %s401
        %p403 = pneg %p109
        %p404 = pneg %p106
        %s405 = sand.u32 %s35, 1
        %s406 = scalar_lea.sflag [#allocation12], %s405
        %s407 = sand.u32 %s142, 1
        %s408 = smul.addr %s407, 128
        %s409 = scalar_lea.vmem [#allocation11], %s408
        %p410 = pneg %p155
        %p411 = pneg %p152
        %s412 = sand.u32 %s35, 1
        %s413 = scalar_lea.sflag [#allocation12], %s412
        %s414 = sand.u32 %s188, 1
        %s415 = smul.addr %s414, 64
        %s416 = scalar_lea.vmem [#allocation13], %s415
        %p417 = pneg %p201
        %p418 = pneg %p198
        %p419 = pneg %p227
        %p420 = pneg %p224
        %s421 = sand.u32 %s214, 1
        %s422 = scalar_lea.sflag [#allocation10], %s421
        %s423 = sand.u32 %s214, 1
        %s424 = smul.addr %s423, 8
        %s425 = scalar_lea.vmem [#allocation14], %s424
        %s426 = smul.u32 2, %s40
        %s427 = smul.u32 %s40, 9
        %s428 = sadd.s32 %s427, %s41
        %s429 = sld [smem:[#allocation5 + %s428]]
        %s430 = smul.u32 2, %s40
        %p431 = scmp.lt.s32.totalorder %s429, 8
        %s432 = scalar_select %p431, %s429, 8
        %p433 = scmp.lt.s32.totalorder %s430, 5
        %s434 = scalar_select %p433, %s430, 5
        %s435 = smul.addr %s432, 6
        %s436 = sadd.s32 %s434, %s435
        %s437 = smul.addr %s436, 8
        %s438 = scalar_lea.vmem %s4, %s437
        %s439 = smul.u32 %s40, 9
        %s440 = sadd.s32 %s439, %s41
        %s441 = sld [smem:[#allocation5 + %s440]]
        %s442 = smul.u32 2, %s40
        %s443 = smul.u32 %s40, 9
        %s444 = sadd.s32 %s443, %s41
        %s445 = sld [smem:[#allocation5 + %s444]]
        %s446 = sld [smem:[#allocation6 + %s444]]
        %p447 = scmp.gt.s32.totalorder %s42, %s446
        %s448 = scalar_select %p447, %s42, %s446
        %s449 = sld [smem:[#allocation7 + %s444]]
        %p450 = scmp.lt.s32.totalorder %s448, %s449
        %s451 = scalar_select %p450, %s448, %s449
        %s452 = smul.u32 2, %s451
        %s453 = smul.u32 %s40, 9
        %s454 = sadd.s32 %s453, %s41
        %s455 = sld [smem:[#allocation5 + %s454]]
        %s456 = sld [smem:[#allocation6 + %s454]]
        %p457 = scmp.gt.s32.totalorder %s42, %s456
        %s458 = scalar_select %p457, %s42, %s456
        %s459 = sld [smem:[#allocation7 + %s454]]
        %p460 = scmp.lt.s32.totalorder %s458, %s459
        %s461 = scalar_select %p460, %s458, %s459
        %s462 = smul.u32 16, %s461
        %s463 = smul.u32 2, %s40
        %s465 = smul.u32 %s40, 9
        %s466 = sadd.s32 %s465, %s41
        %p467 = scmp.eq.s32.totalorder %s41, 0
        %p468 = scmp.eq.s32.totalorder %s42, 0
        %p469 = pnand %p467, %p468
        %p470 = pneg %p469
        // Predicated region
        $region49: #{tpu_custom_call.1} parent=35 // pred_check
          _
        $region50: #{tpu_custom_call.1} parent=35 // pred_check_branch
          %472 = sbr.rel (%p469) target = $region52
        $region51: #{tpu_custom_call.1} parent=35 // pred_region
          %473 = vst [vmem:[#allocation2] sm:$0xff] 0.0
          %474 = vst [vmem:[#allocation2 + $0x8] sm:$0xff] 0.0
        $region52: #{tpu_custom_call.1} parent=35 // pred_fallthru
          _
        %s475 = sld [smem:[#allocation5 + %s466]]
        %p476 = scmp.eq.s32.totalorder %s475, %s41
        %s477 = sld [smem:[#allocation7 + %s466]]
        %p478 = scmp.le.s32.totalorder %s42, %s477
        %p479 = pnand %p476, %p478
        %p480 = pneg %p479
        // Predicated region
        $region53: #{tpu_custom_call.1} parent=35 // pred_check
          _
        $region54: #{tpu_custom_call.1} parent=35 // pred_check_branch
          %482 = sbr.rel (%p479) target = $region56
        $region55: #{tpu_custom_call.1} parent=35 // pred_region
          // Predicated region
          $region57: #{tpu_custom_call.1} parent=55 // pred_check
            %p483 = pneg %p468
          $region58: #{tpu_custom_call.1} parent=55 // pred_check_branch
            %485 = sbr.rel (%p483) target = $region60
          $region59: #{tpu_custom_call.1} parent=55 // pred_region
            %v486 = vld [vmem:[%s361] sm:$0xf]
            %v487 = vld [vmem:[%s361 + $0x4] sm:$0xf]
            %v488 = vunpack.c.l.bf16 %v486
            %v489 = vunpack.c.l.bf16 %v487
            %v490 = vld [vmem:[%s438] sm:$0xff]
            %v491 = vld [vmem:[%s438 + $0x8] sm:$0xff]
            %493 = vset.pattern.permute.xlu0 0
            %494 = vperm.xlu0 %493, %v490
            %v495 = vpop.permute.xlu0 %494
            %498 = vset.pattern.permute.xlu0 0
            %499 = vperm.xlu0 %498, %v491
            %v500 = vpop.permute.xlu0 %499
            %v502 = vmul.f32 %v488, %v495
            %v503 = vmul.f32 %v489, %v500
            %v504 = vpack.c.bf16 %v503, %v502
            %505 = vst [vmem:[#allocation3] sm:$0xff] %v504
          $region60: #{tpu_custom_call.1} parent=55 // pred_fallthru
            _
          %v506 = vld [vmem:[#allocation3] sm:$0xff]
          %v507 = vld [vmem:[%s370] sm:$0xff]
          %v508 = vld [vmem:[%s370 + $0x8] sm:$0xff]
          %v509 = vld [vmem:[%s370 + $0x10] sm:$0xff]
          %v510 = vld [vmem:[%s370 + $0x18] sm:$0xff]
          %v511 = vld [vmem:[%s370 + $0x20] sm:$0xff]
          %v512 = vld [vmem:[%s370 + $0x28] sm:$0xff]
          %v513 = vld [vmem:[%s370 + $0x30] sm:$0xff]
          %v514 = vld [vmem:[%s370 + $0x38] sm:$0xff]
          %v515 = vld [vmem:[%s370 + $0x40] sm:$0xff]
          %v516 = vld [vmem:[%s370 + $0x48] sm:$0xff]
          %v517 = vld [vmem:[%s370 + $0x50] sm:$0xff]
          %v518 = vld [vmem:[%s370 + $0x58] sm:$0xff]
          %v519 = vld [vmem:[%s370 + $0x60] sm:$0xff]
          %v520 = vld [vmem:[%s370 + $0x68] sm:$0xff]
          %v521 = vld [vmem:[%s370 + $0x70] sm:$0xff]
          %v522 = vld [vmem:[%s370 + $0x78] sm:$0xff]
          %v539 = vunpack.c.l.b16 %v507
          %v540 = vunpack.c.h.b16 %v507
          %v541 = vunpack.c.l.b16 %v508
          %v542 = vunpack.c.h.b16 %v508
          %v543 = vunpack.c.l.b16 %v509
          %v544 = vunpack.c.h.b16 %v509
          %v545 = vunpack.c.l.b16 %v510
          %v546 = vunpack.c.h.b16 %v510
          %v547 = vunpack.c.l.b16 %v511
          %v548 = vunpack.c.h.b16 %v511
          %v549 = vunpack.c.l.b16 %v512
          %v550 = vunpack.c.h.b16 %v512
          %v551 = vunpack.c.l.b16 %v513
          %v552 = vunpack.c.h.b16 %v513
          %v553 = vunpack.c.l.b16 %v514
          %v554 = vunpack.c.h.b16 %v514
          %v555 = vunpack.c.l.b16 %v515
          %v556 = vunpack.c.h.b16 %v515
          %v557 = vunpack.c.l.b16 %v516
          %v558 = vunpack.c.h.b16 %v516
          %v559 = vunpack.c.l.b16 %v517
          %v560 = vunpack.c.h.b16 %v517
          %v561 = vunpack.c.l.b16 %v518
          %v562 = vunpack.c.h.b16 %v518
          %v563 = vunpack.c.l.b16 %v519
          %v564 = vunpack.c.h.b16 %v519
          %v565 = vunpack.c.l.b16 %v520
          %v566 = vunpack.c.h.b16 %v520
          %v567 = vunpack.c.l.b16 %v521
          %v568 = vunpack.c.h.b16 %v521
          %v569 = vunpack.c.l.b16 %v522
          %v570 = vunpack.c.h.b16 %v522
          %v571 = vpack.c.b16 %v541, %v539
          %v572 = vpack.c.b16 %v542, %v540
          %v573 = vpack.c.b16 %v545, %v543
          %v574 = vpack.c.b16 %v546, %v544
          %v575 = vpack.c.b16 %v549, %v547
          %v576 = vpack.c.b16 %v550, %v548
          %v577 = vpack.c.b16 %v553, %v551
          %v578 = vpack.c.b16 %v554, %v552
          %v579 = vpack.c.b16 %v557, %v555
          %v580 = vpack.c.b16 %v558, %v556
          %v581 = vpack.c.b16 %v561, %v559
          %v582 = vpack.c.b16 %v562, %v560
          %v583 = vpack.c.b16 %v565, %v563
          %v584 = vpack.c.b16 %v566, %v564
          %v585 = vpack.c.b16 %v569, %v567
          %v586 = vpack.c.b16 %v570, %v568
          %603 = vmatprep.subr.bf16.mxu0 %v572
          %604 = vmatpush1.bf16.msra.mxu0 %v571
          %605 = vmatprep.subr.bf16.mxu0 %v574
          %606 = vmatpush1.bf16.msra.mxu0 %v573
          %607 = vmatprep.subr.bf16.mxu0 %v576
          %608 = vmatpush1.bf16.msra.mxu0 %v575
          %609 = vmatprep.subr.bf16.mxu0 %v578
          %610 = vmatpush1.bf16.msra.mxu0 %v577
          %611 = vmatprep.subr.bf16.mxu0 %v580
          %612 = vmatpush1.bf16.msra.mxu0 %v579
          %613 = vmatprep.subr.bf16.mxu0 %v582
          %614 = vmatpush1.bf16.msra.mxu0 %v581
          %615 = vmatprep.subr.bf16.mxu0 %v584
          %616 = vmatpush1.bf16.msra.mxu0 %v583
          %617 = vmatprep.subr.bf16.mxu0 %v586
          %618 = vmatpush1.bf16.msra.mxu0 %v585
          %619 = vmatprep.subr.bf16.mxu0 0
          %620 = vmatpush1.bf16.msra.mxu0 0
          %621 = vmatprep.subr.bf16.mxu0 0
          %622 = vmatpush1.bf16.msra.mxu0 0
          %623 = vmatprep.subr.bf16.mxu0 0
          %624 = vmatpush1.bf16.msra.mxu0 0
          %625 = vmatprep.subr.bf16.mxu0 0
          %626 = vmatpush1.bf16.msra.mxu0 0
          %627 = vmatprep.subr.bf16.mxu0 0
          %628 = vmatpush1.bf16.msra.mxu0 0
          %629 = vmatprep.subr.bf16.mxu0 0
          %630 = vmatpush1.bf16.msra.mxu0 0
          %631 = vmatprep.subr.bf16.mxu0 0
          %632 = vmatpush1.bf16.msra.mxu0 0
          %633 = vmatprep.subr.bf16.mxu0 0
          %634 = vmatpush1.bf16.msra.mxu0 0
          %635 = vmatprep.mubr.bf16.mxu0 0
          %636 = vmatmul.mubr.bf16.gmra.mrb[0].mxu0 %v506
          %v637 = vpop.f32.mrb[0].mxu0
          %v638 = vadd.f32 0.0, %v637
          %v639 = vpop.f32.mrb[0].mxu0
          %v640 = vadd.f32 0.0, %v639
          %v641 = vpop.f32.mrb[0].mxu0
          %v642 = vadd.f32 0.0, %v641
          %v643 = vpop.f32.mrb[0].mxu0
          %v644 = vadd.f32 0.0, %v643
          %645 = vdwg.mxu0
          %v646 = vxor.u32 %v638, 2147483648
          %v647 = vxor.u32 %v642, 2147483648
          %v648 = vmul.f32 %v646, 1.442695
          %v649 = vpow.pop %v648
          %v650 = vmul.f32 %v647, 1.442695
          %v651 = vpow.pop %v650
          %v652 = vadd.f32 %v649, 1.0
          %v653 = vadd.f32 %v651, 1.0
          %v654 = vrcp.pop %v652
          %v655 = vmul.f32 1.0, %v654
          %v656 = vrcp.pop %v653
          %v657 = vmul.f32 1.0, %v656
          %v658 = vmul.f32 %v638, %v655
          %v659 = vmul.f32 %v642, %v657
          %v660 = vmul.f32 %v658, %v640
          %v661 = vmul.f32 %v659, %v644
          %v662 = vpack.c.bf16 %v661, %v660
          %v663 = vld [vmem:[#allocation2] sm:$0xff]
          %v664 = vld [vmem:[#allocation2 + $0x8] sm:$0xff]
          %v665 = vld [vmem:[%s379] sm:$0xf]
          %v666 = vld [vmem:[%s379 + $0x4] sm:$0xf]
          %v667 = vld [vmem:[%s379 + $0x8] sm:$0xf]
          %v668 = vld [vmem:[%s379 + $0xc] sm:$0xf]
          %v669 = vld [vmem:[%s379 + $0x10] sm:$0xf]
          %v670 = vld [vmem:[%s379 + $0x14] sm:$0xf]
          %v671 = vld [vmem:[%s379 + $0x18] sm:$0xf]
          %v672 = vld [vmem:[%s379 + $0x1c] sm:$0xf]
          %v673 = vld [vmem:[%s379 + $0x20] sm:$0xf]
          %v674 = vld [vmem:[%s379 + $0x24] sm:$0xf]
          %v675 = vld [vmem:[%s379 + $0x28] sm:$0xf]
          %v676 = vld [vmem:[%s379 + $0x2c] sm:$0xf]
          %v677 = vld [vmem:[%s379 + $0x30] sm:$0xf]
          %v678 = vld [vmem:[%s379 + $0x34] sm:$0xf]
          %v679 = vld [vmem:[%s379 + $0x38] sm:$0xf]
          %v680 = vld [vmem:[%s379 + $0x3c] sm:$0xf]
          %v697 = vunpack.c.l.b16 %v665
          %v698 = vunpack.c.l.b16 %v666
          %v699 = vunpack.c.l.b16 %v667
          %v700 = vunpack.c.l.b16 %v668
          %v701 = vunpack.c.l.b16 %v669
          %v702 = vunpack.c.l.b16 %v670
          %v703 = vunpack.c.l.b16 %v671
          %v704 = vunpack.c.l.b16 %v672
          %v705 = vunpack.c.l.b16 %v673
          %v706 = vunpack.c.l.b16 %v674
          %v707 = vunpack.c.l.b16 %v675
          %v708 = vunpack.c.l.b16 %v676
          %v709 = vunpack.c.l.b16 %v677
          %v710 = vunpack.c.l.b16 %v678
          %v711 = vunpack.c.l.b16 %v679
          %v712 = vunpack.c.l.b16 %v680
          %v713 = vpack.c.b16 %v698, %v697
          %v714 = vpack.c.b16 %v700, %v699
          %v715 = vpack.c.b16 %v702, %v701
          %v716 = vpack.c.b16 %v704, %v703
          %v717 = vpack.c.b16 %v706, %v705
          %v718 = vpack.c.b16 %v708, %v707
          %v719 = vpack.c.b16 %v710, %v709
          %v720 = vpack.c.b16 %v712, %v711
          %729 = vmatprep.subr.bf16.mxu0 0
          %730 = vmatpush1.bf16.msra.mxu0 %v713
          %731 = vmatprep.subr.bf16.mxu0 0
          %732 = vmatpush1.bf16.msra.mxu0 %v714
          %733 = vmatprep.subr.bf16.mxu0 0
          %734 = vmatpush1.bf16.msra.mxu0 %v715
          %735 = vmatprep.subr.bf16.mxu0 0
          %736 = vmatpush1.bf16.msra.mxu0 %v716
          %737 = vmatprep.subr.bf16.mxu0 0
          %738 = vmatpush1.bf16.msra.mxu0 %v717
          %739 = vmatprep.subr.bf16.mxu0 0
          %740 = vmatpush1.bf16.msra.mxu0 %v718
          %741 = vmatprep.subr.bf16.mxu0 0
          %742 = vmatpush1.bf16.msra.mxu0 %v719
          %743 = vmatprep.subr.bf16.mxu0 0
          %744 = vmatpush1.bf16.msra.mxu0 %v720
          %745 = vmatprep.subr.bf16.mxu0 0
          %746 = vmatpush1.bf16.msra.mxu0 0
          %747 = vmatprep.subr.bf16.mxu0 0
          %748 = vmatpush1.bf16.msra.mxu0 0
          %749 = vmatprep.subr.bf16.mxu0 0
          %750 = vmatpush1.bf16.msra.mxu0 0
          %751 = vmatprep.subr.bf16.mxu0 0
          %752 = vmatpush1.bf16.msra.mxu0 0
          %753 = vmatprep.subr.bf16.mxu0 0
          %754 = vmatpush1.bf16.msra.mxu0 0
          %755 = vmatprep.subr.bf16.mxu0 0
          %756 = vmatpush1.bf16.msra.mxu0 0
          %757 = vmatprep.subr.bf16.mxu0 0
          %758 = vmatpush1.bf16.msra.mxu0 0
          %759 = vmatprep.subr.bf16.mxu0 0
          %760 = vmatpush1.bf16.msra.mxu0 0
          %761 = vmatprep.mubr.bf16.mxu0 0
          %762 = vmatmul.mubr.bf16.gmra.mrb[0].mxu0 %v662
          %v763 = vpop.f32.mrb[0].mxu0
          %v764 = vadd.f32 0.0, %v763
          %v765 = vpop.f32.mrb[0].mxu0
          %v766 = vpop.f32.mrb[0].mxu0
          %v767 = vadd.f32 0.0, %v766
          %v768 = vpop.f32.mrb[0].mxu0
          %769 = vdwg.mxu0
          %v770 = vadd.f32 %v663, %v764
          %v771 = vadd.f32 %v664, %v767
          %772 = vst [vmem:[#allocation2] sm:$0xff] %v770
          %773 = vst [vmem:[#allocation2 + $0x8] sm:$0xff] %v771
        $region56: #{tpu_custom_call.1} parent=35 // pred_fallthru
          _
        %p774 = scmp.eq.s32.totalorder %s41, 8
        %p775 = scmp.eq.s32.totalorder %s42, 2
        %p776 = pnand %p774, %p775
        %p777 = pneg %p776
        // Predicated region
        $region61: #{tpu_custom_call.1} parent=35 // pred_check
          _
        $region62: #{tpu_custom_call.1} parent=35 // pred_check_branch
          %779 = sbr.rel (%p776) target = $region64
        $region63: #{tpu_custom_call.1} parent=35 // pred_region
          %v780 = vld [vmem:[#allocation2] sm:$0xff]
          %v781 = vld [vmem:[#allocation2 + $0x8] sm:$0xff]
          %v782 = vpack.c.bf16 %v781, %v780
          %v784 = vunpack.c.l.b16 %v782
          %v785 = vunpack.c.h.b16 %v782
          %v786 = vpack.c.b16 %v784, %v784
          %v787 = vpack.c.b16 %v785, %v785
          %790 = vst [vmem:[%s425] sm:$0xf] %v786
          %791 = vst [vmem:[%s425 + $0x4] sm:$0xf] %v787
        $region64: #{tpu_custom_call.1} parent=35 // pred_fallthru
          _
        %s792 = sand.u32 %s214, 1
        %s793 = scalar_lea.sflag [#allocation10], %s792
        %s794 = sand.u32 %s214, 1
        %s795 = smul.addr %s794, 8
        %s796 = scalar_lea.vmem [#allocation14], %s795
        // Predicated region
        $region65: #{tpu_custom_call.1} parent=35 // pred_check
          %p797 = pneg %p224
        $region66: #{tpu_custom_call.1} parent=35 // pred_check_branch
          %799 = sbr.rel (%p797) target = $region68
        $region67: #{tpu_custom_call.1} parent=35 // pred_region
          %s800 = smul.u32 2, %s40
          %s802 = ssub.s32 128, 128
          %803 = vsyncadd %s793, %s802
          %s804 = smul.addr %s800, 64
          %s805 = scalar_lea.hbm %s7, %s804
          %s806 = sshll.u32 %s796, 4
          %s807 = int_to_ptr.vmem [resolvable:$true] %s806
          %812 = dma.vmem_to_hbm [thread:$0]  %s807, 128, %s805, %s793, 64, 64, 4
        $region68: #{tpu_custom_call.1} parent=35 // pred_fallthru
          _
      $region36: #{tpu_custom_call.1} parent=5 // pred_fallthru
        _
      %p813 = scmp.le.s32.totalorder 2, %s30
      // Predicated region
      $region69: #{tpu_custom_call.1} parent=5 // pred_check
        %p814 = pneg %p813
      $region70: #{tpu_custom_call.1} parent=5 // pred_check_branch
        %816 = sbr.rel (%p814) target = $region72
      $region71: #{tpu_custom_call.1} parent=5 // pred_region
        %s817 = ssub.s32 %s30, 2
        // Predicated region
        $region73: #{tpu_custom_call.1} parent=71 // pred_check
          %p818 = pneg %p230
        $region74: #{tpu_custom_call.1} parent=71 // pred_check_branch
          %820 = sbr.rel (%p818) target = $region76
        $region75: #{tpu_custom_call.1} parent=71 // pred_region
          %s821 = sand.u32 %s215, 1
          %s822 = scalar_lea.sflag [#allocation10], %s821
          %s823 = sand.u32 %s215, 1
          %s824 = smul.addr %s823, 8
          %s825 = scalar_lea.vmem [#allocation14], %s824
          %826 = dma.done %s822, 128
        $region76: #{tpu_custom_call.1} parent=71 // pred_fallthru
          _
      $region72: #{tpu_custom_call.1} parent=5 // pred_fallthru
        _
    $region6: #{tpu_custom_call.1} parent=1 // loop_footer
      %s34 = sadd.s32 1, %s30
    $region7: #{tpu_custom_call.1} parent=1 // loop_footer_branch
      %29 = sbr.rel target = $region3
    $region8: #{tpu_custom_call.1} parent=1 // loop_exit
      _
    %827 = vsyncpa [#allocation9], 1
    %s828 = scalar_lea.sflag [#allocation9], 1
    %829 = vsyncpa %s828, 1
    %830 = vsyncpa [#allocation12], 1
    %s831 = scalar_lea.sflag [#allocation12], 1
    %832 = vsyncpa %s831, 1
    %833 = vsyncpa [#allocation10], 1
    %s834 = scalar_lea.sflag [#allocation10], 1
    %835 = vsyncpa %s834, 1

</llo_original>
